<compile_context>
chip_gen: v6e
topology: v6e:2x2x1
jax: 0.10.0
libtpu: 0.0.40
codegen_flags: <defaults>
</compile_context>

<pallas_src>
import functools

import jax
import jax.numpy as jnp
from jax.experimental import pallas as pl
from jax.experimental.pallas import tpu as pltpu


def _linear_tb_kernel(xT_ref, w_ref, b_ref, o_ref):
    """One batch tile of y^T = W @ x^T + b.

    xT_ref: (IN, TB)   f32, VMEM  -- input, batch on lanes
    w_ref:  (OUT*IN,)  f32, SMEM  -- flattened nn.Linear weight (row-major)
    b_ref:  (OUT,)     f32, SMEM  -- bias
    o_ref:  (OUT, TB)  f32, VMEM  -- output y^T, batch on lanes
    """
    in_features = xT_ref.shape[0]
    out_features = o_ref.shape[0]
    for o in range(out_features):            # OUT == 1: fully unrolled
        acc = xT_ref[0:1, :] * w_ref[o * in_features + 0]
        for k in range(1, in_features):      # IN == 3: unrolled VPU FMAs
            acc = acc + xT_ref[k:k + 1, :] * w_ref[o * in_features + k]
        o_ref[o:o + 1, :] = acc + b_ref[o]


def _round_up(x, m):
    return ((x + m - 1) // m) * m


@functools.partial(jax.jit, static_argnames=("block_b",))
def simple_onnx_model(x, weight, bias, *, block_b=512):
    """y = x @ weight.T + bias, computed in a Pallas TPU kernel.

    x:      (B, IN)   float32  (PyTorch-style input layout)
    weight: (OUT, IN) float32  (PyTorch nn.Linear layout)
    bias:   (OUT,)    float32
    returns (B, OUT)  float32
    """
    B, IN = x.shape
    OUT, IN_w = weight.shape
    assert IN_w == IN

    # Lane tile over the batch axis: >=128, 512-class when B is large.
    tb = min(block_b, _round_up(B, 128))
    Bp = _round_up(B, tb)

    # Layout plumbing (cheap XLA ops outside the kernel): batch -> lanes.
    xT = x.T                                             # (IN, B)
    if Bp != B:
        xT = jnp.pad(xT, ((0, 0), (0, Bp - B)))

    w_flat = weight.reshape(-1).astype(jnp.float32)      # (OUT*IN,) -> SMEM
    b_flat = bias.reshape(-1).astype(jnp.float32)        # (OUT,)    -> SMEM

    yT = pl.pallas_call(
        _linear_tb_kernel,
        out_shape=jax.ShapeDtypeStruct((OUT, Bp), jnp.float32),
        grid=(Bp // tb,),
        in_specs=[
            pl.BlockSpec((IN, tb), lambda i: (0, i)),    # streamed x tile
            pl.BlockSpec(memory_space=pltpu.SMEM),       # weight scalars
            pl.BlockSpec(memory_space=pltpu.SMEM),       # bias scalar(s)
        ],
        out_specs=pl.BlockSpec((OUT, tb), lambda i: (0, i)),
        compiler_params=pltpu.CompilerParams(
            dimension_semantics=("parallel",),           # 2 TCs on v7x
        ),
    )(xT, w_flat, b_flat)

    return yT[:, :B].T                                   # (B, OUT)


if __name__ == "__main__":
    key = jax.random.PRNGKey(0)
    kx, kw, kb = jax.random.split(key, 3)

    B, IN, OUT = 256, 3, 1   # small, but lane-dense batch

    # Deterministic "parameter init" mimicking nn.Linear(3, 1) layout.
    bound = 1.0 / (IN ** 0.5)
    weight = jax.random.uniform(
        kw, (OUT, IN), dtype=jnp.float32, minval=-bound, maxval=bound)
    bias = jax.random.uniform(
        kb, (OUT,), dtype=jnp.float32, minval=-bound, maxval=bound)

    x = jax.random.normal(kx, (B, IN), dtype=jnp.float32)

    y = simple_onnx_model(x, weight, bias)
    y = jax.block_until_ready(y)

    # Reference: same math as torch's nn.Linear forward, x @ W^T + b.
    y_ref = x @ weight.T + bias[None, :]
    assert y.shape == (B, OUT)
    assert jnp.allclose(y, y_ref, atol=1e-5, rtol=1e-5)

    print("KERNEL_OK")
</pallas_src>

<mosaic_0001>
module attributes {stable_mosaic.version = 11 : i64} {
  func.func @_linear_tb_kernel(%arg0: i32, %arg1: memref<3x256xf32, #tpu.memory_space<vmem>>, %arg2: memref<3xf32, #tpu.memory_space<smem>>, %arg3: memref<1xf32, #tpu.memory_space<smem>>, %arg4: memref<1x256xf32, #tpu.memory_space<vmem>>) attributes {dimension_semantics = [#tpu.dimension_semantics<parallel>], iteration_bounds = array<i64: 1>, scalar_prefetch = 0 : i64, scratch_operands = 0 : i64, tpu.core_type = #tpu.core_type<tc>, window_params = [{transform_indices = @transform_0, window_bounds = array<i64: 3, 256>}, {transform_indices = @transform_1, window_bounds = array<i64: 3>}, {transform_indices = @transform_2, window_bounds = array<i64: 1>}, {transform_indices = @transform_3, window_bounds = array<i64: 1, 256>}]} {
    %c0 = arith.constant 0 : index
    %c0_0 = arith.constant 0 : index
    %0 = vector.load %arg1[%c0, %c0_0] : memref<3x256xf32, #tpu.memory_space<vmem>>, vector<1x256xf32>
    %c0_1 = arith.constant 0 : index
    %1 = memref.load %arg2[%c0_1] : memref<3xf32, #tpu.memory_space<smem>>
    %2 = vector.broadcast %1 : f32 to vector<1x256xf32>
    %3 = arith.mulf %0, %2 : vector<1x256xf32>
    %c1 = arith.constant 1 : index
    %c0_2 = arith.constant 0 : index
    %4 = vector.load %arg1[%c1, %c0_2] : memref<3x256xf32, #tpu.memory_space<vmem>>, vector<1x256xf32>
    %c1_3 = arith.constant 1 : index
    %5 = memref.load %arg2[%c1_3] : memref<3xf32, #tpu.memory_space<smem>>
    %6 = vector.broadcast %5 : f32 to vector<1x256xf32>
    %7 = arith.mulf %4, %6 : vector<1x256xf32>
    %8 = arith.addf %3, %7 : vector<1x256xf32>
    %c2 = arith.constant 2 : index
    %c0_4 = arith.constant 0 : index
    %9 = vector.load %arg1[%c2, %c0_4] : memref<3x256xf32, #tpu.memory_space<vmem>>, vector<1x256xf32>
    %c2_5 = arith.constant 2 : index
    %10 = memref.load %arg2[%c2_5] : memref<3xf32, #tpu.memory_space<smem>>
    %11 = vector.broadcast %10 : f32 to vector<1x256xf32>
    %12 = arith.mulf %9, %11 : vector<1x256xf32>
    %13 = arith.addf %8, %12 : vector<1x256xf32>
    %c0_6 = arith.constant 0 : index
    %14 = memref.load %arg3[%c0_6] : memref<1xf32, #tpu.memory_space<smem>>
    %15 = vector.broadcast %14 : f32 to vector<1x256xf32>
    %16 = arith.addf %13, %15 : vector<1x256xf32>
    %c0_7 = arith.constant 0 : index
    %c0_8 = arith.constant 0 : index
    %17 = vector.load %arg4[%c0_7, %c0_8] : memref<1x256xf32, #tpu.memory_space<vmem>>, vector<1x256xf32>
    tpu.vector_store %arg4[%c0_7, %c0_8], %16 {strides = array<i32>} : memref<1x256xf32, #tpu.memory_space<vmem>>, vector<1x256xf32>,
    return
  }
  func.func @transform_0(%arg0: i32) -> (i32, i32) {
    %c0_i32 = arith.constant 0 : i32
    %c0_i32_0 = arith.constant 0 : i32
    return %c0_i32, %arg0 : i32, i32
  }
  func.func @transform_1(%arg0: i32) -> i32 {
    %c0_i32 = arith.constant 0 : i32
    %c0_i32_0 = arith.constant 0 : i32
    return %c0_i32 : i32
  }
  func.func @transform_2(%arg0: i32) -> i32 {
    %c0_i32 = arith.constant 0 : i32
    %c0_i32_0 = arith.constant 0 : i32
    return %c0_i32 : i32
  }
  func.func @transform_3(%arg0: i32) -> (i32, i32) {
    %c0_i32 = arith.constant 0 : i32
    %c0_i32_0 = arith.constant 0 : i32
    return %c0_i32, %arg0 : i32, i32
  }
}

</mosaic_0001>

<llo_original>
// kernel: simple_onnx_model.1
$region0: #{simple_onnx_model.1}
  #allocation0 [shape = 'u32[]', space=smem, size = 0x4, offset = 0x4, fixed_abs, tag = 'smem constant byte address 0x4 - core index']
  #allocation1 [shape = 'u32[144,128]{1,0:T(1,128)}', space=vmem, size = 0x12000, scoped, tag = 'internal scratch']
  #allocation2 [shape = 'f32[1]{0:T(128)S(6)}', space=smem, size = 0x200, scoped, tag = 'scoped memory for simple_onnx_model.1']
  %s0 = inlined_call_operand.hbm [shape: f32[3,256], index: 0, kind: input, shape index: {}]
  %s1 = inlined_call_operand.vmem [shape: f32[3], index: 1, kind: input, shape index: {}]
  %s2 = inlined_call_operand.<no memory space> [shape: f32[1], index: 2, kind: input, shape index: {}]
  %s3 = inlined_call_operand.hbm [shape: f32[1,256], index: 3, kind: output, shape index: {}]
  %s4 = sld [smem:[#allocation0]]
  $region30: #{simple_onnx_model.1} parent=0
    _
  %s6 = ssub.s32 1, %s4
  %s7 = scalar_select 0, %s6, %s4
  %8 = sst [smem:[#allocation2]] %s2
  $region1: #{simple_onnx_model.1} parent=0
    #allocation3 [shape = 'u8[4096]{0}', space=vmem, size = 0x1000, scoped, tag = 'input window, operand 0, single buffered']
    #allocation4 [shape = 's32[1]{0}', space=sflag, size = 0x4, scoped, tag = 'scoped memory for simple_onnx_model.1']
    #allocation5 [shape = 's32[1]{0}', space=sflag, size = 0x4, scoped, tag = 'scoped memory for simple_onnx_model.1']
    #allocation6 [shape = 's32[1]{0}', space=sflag, size = 0x4, scoped, tag = 'scoped memory for simple_onnx_model.1']
    #allocation7 [shape = 'u8[512]{0}', space=smem, size = 0x200, scoped, tag = 'input window, operand 1, single buffered']
    #allocation8 [shape = 'u8[1024]{0}', space=vmem, size = 0x400, scoped, tag = 'output window, operand 0, single buffered']
    %9 = vsyncpa [#allocation4], 0
    %10 = vsyncpa [#allocation6], 0
    %11 = vsyncpa [#allocation5], 0
    // Predicated region
    $region2: #{simple_onnx_model.1} parent=1 // pred_check
      _
    $region3: #{simple_onnx_model.1} parent=1 // pred_check_branch
      %13 = sbr.rel (0) target = $region5
    $region4: #{simple_onnx_model.1} parent=1 // pred_region
      %s15 = ssub.s32 128, 128
      %16 = vsyncadd [#allocation4], %s15
      %s18 = sshll.u32 [#allocation3], 4
      %s19 = int_to_ptr.vmem [resolvable:$true] %s18
      %21 = dma.hbm_to_vmem [thread:$0]  %s0, 128, %s19, [#allocation4]
    $region5: #{simple_onnx_model.1} parent=1 // pred_fallthru
      _
    // Predicated region
    $region6: #{simple_onnx_model.1} parent=1 // pred_check
      _
    $region7: #{simple_onnx_model.1} parent=1 // pred_check_branch
      %23 = sbr.rel (0) target = $region9
    $region8: #{simple_onnx_model.1} parent=1 // pred_region
      %s25 = ssub.s32 16, 16
      %26 = vsyncadd [#allocation6], %s25
      %s28 = sshll.u32 %s1, 4
      %s29 = int_to_ptr.vmem [resolvable:$true] %s28
      %31 = dma.vmem_to_smem %s29, 16, [#allocation7], [#allocation6]
    $region9: #{simple_onnx_model.1} parent=1 // pred_fallthru
      _
    // Predicated region
    $region10: #{simple_onnx_model.1} parent=1 // pred_check
      _
    $region11: #{simple_onnx_model.1} parent=1 // pred_check_branch
      %33 = sbr.rel (0) target = $region13
    $region12: #{simple_onnx_model.1} parent=1 // pred_region
      _
    $region13: #{simple_onnx_model.1} parent=1 // pred_fallthru
      _
    // Predicated region
    $region14: #{simple_onnx_model.1} parent=1 // pred_check
      _
    $region15: #{simple_onnx_model.1} parent=1 // pred_check_branch
      %35 = sbr.rel (0) target = $region17
    $region16: #{simple_onnx_model.1} parent=1 // pred_region
      %36 = dma.done [#allocation4], 128
    $region17: #{simple_onnx_model.1} parent=1 // pred_fallthru
      _
    // Predicated region
    $region18: #{simple_onnx_model.1} parent=1 // pred_check
      _
    $region19: #{simple_onnx_model.1} parent=1 // pred_check_branch
      %38 = sbr.rel (0) target = $region21
    $region20: #{simple_onnx_model.1} parent=1 // pred_region
      %39 = dma.done [#allocation6], 16
    $region21: #{simple_onnx_model.1} parent=1 // pred_fallthru
      _
    %40 = sfence
    %v41 = vld [vmem:[#allocation3] ss:$4 sm:$0x3]
    %s42 = sld [smem:[#allocation7]]
    %v43 = vstv %s42
    %v44 = vmul.f32 %v41, %v43
    %s45 = scalar_lea.vmem [#allocation3], 1
    %v46 = vld [vmem:[%s45] ss:$4 sm:$0x3]
    %s47 = sld [smem:[#allocation7 + $0x1]]
    %v48 = vstv %s47
    %v49 = vmul.f32 %v46, %v48
    %v50 = vadd.f32 %v44, %v49
    %s51 = scalar_lea.vmem [#allocation3], 2
    %v52 = vld [vmem:[%s51] ss:$4 sm:$0x3]
    %s53 = sld [smem:[#allocation7 + $0x2]]
    %v54 = vstv %s53
    %v55 = vmul.f32 %v52, %v54
    %v56 = vadd.f32 %v50, %v55
    %s57 = sld [smem:[#allocation2]]
    %v58 = vstv %s57
    %v59 = vadd.f32 %v56, %v58
    %v60 = vlaneseq
    %vm61 = vcmp.ge.s32.totalorder %v60, 0
    %vm62 = vcmp.lt.s32.totalorder %v60, 256
    %vm63 = vmand %vm61, %vm62
    %64 = vst.msk [vmem:[#allocation8] sm:$0x3] %vm63, %v59
    // Predicated region
    $region22: #{simple_onnx_model.1} parent=1 // pred_check
      _
    $region23: #{simple_onnx_model.1} parent=1 // pred_check_branch
      %66 = sbr.rel (0) target = $region25
    $region24: #{simple_onnx_model.1} parent=1 // pred_region
      %s68 = ssub.s32 32, 32
      %69 = vsyncadd [#allocation5], %s68
      %s71 = sshll.u32 [#allocation8], 4
      %s72 = int_to_ptr.vmem [resolvable:$true] %s71
      %74 = dma.vmem_to_hbm [thread:$0]  %s72, 32, %s3, [#allocation5]
    $region25: #{simple_onnx_model.1} parent=1 // pred_fallthru
      _
    // Predicated region
    $region26: #{simple_onnx_model.1} parent=1 // pred_check
      _
    $region27: #{simple_onnx_model.1} parent=1 // pred_check_branch
      %76 = sbr.rel (0) target = $region29
    $region28: #{simple_onnx_model.1} parent=1 // pred_region
      %77 = dma.done [#allocation5], 32
    $region29: #{simple_onnx_model.1} parent=1 // pred_fallthru
      _
    %78 = vsyncpa [#allocation4], 1
    %79 = vsyncpa [#allocation5], 1
    %80 = vsyncpa [#allocation6], 1

</llo_original>
